<compile_context>
chip_gen: v5e
topology: v5e:2x2
jax: 0.10.0
libtpu: 0.0.40
codegen_flags: <defaults>
</compile_context>

<pallas_src>
import functools

import jax
import jax.numpy as jnp
from jax.experimental import pallas as pl
from jax.experimental.pallas import tpu as pltpu

LANE = 128        # TPU lane width; fused head output is padded to this
NEG_BIG = -1e30   # finite "-inf" for softmax masking (exp underflows to 0)


def _round_up(x, m):
    return (x + m - 1) // m * m


def _actor_critic_kernel(num_actions,
                         state_ref, w1_ref, b1_ref, wh_ref, bh_ref, out_ref):
    # fc1 + ReLU (bf16 operands, fp32 MXU accumulation, fp32 elementwise).
    x = jnp.dot(state_ref[...], w1_ref[...],
                preferred_element_type=jnp.float32) + b1_ref[...]
    x = jnp.maximum(x, 0.0)

    # Fused actor+critic head: one lane-dense [TB, 128] matmul.
    fused = jnp.dot(x.astype(wh_ref.dtype), wh_ref[...],
                    preferred_element_type=jnp.float32) + bh_ref[...]

    lane = jax.lax.broadcasted_iota(jnp.int32, fused.shape, dimension=1)
    actor_mask = lane < num_actions

    # Stable softmax over the actor lanes only; padded lanes -> exp underflows to 0.
    logits = jnp.where(actor_mask, fused, NEG_BIG)
    m = jnp.max(logits, axis=-1, keepdims=True)
    e = jnp.exp(logits - m)
    denom = jnp.sum(e, axis=-1, keepdims=True)
    inv = 1.0 / denom                      # exact reciprocal -> rows sum to 1
    probs = e * inv

    # Output slab: probs in lanes [0:A], critic value in lane A, zeros elsewhere.
    value_lane = jnp.where(lane == num_actions, fused, 0.0)
    out_ref[...] = (probs + value_lane).astype(out_ref.dtype)


def actor_critic_forward(state, w1, b1, wa, ba, wc, bc,
                         *, block_batch=512, use_bf16=True):
    """ActorCritic forward: returns (action_probs [B, A], state_value [B, 1]) fp32."""
    B, in_dim = state.shape
    H = w1.shape[1]
    A = wa.shape[1]
    assert A + 1 <= LANE, "output_dim + 1 must fit in one 128-lane slab"

    # Fuse actor + critic heads into one lane-dense weight/bias (zero padding).
    w_head = jnp.zeros((H, LANE), jnp.float32)
    w_head = w_head.at[:, :A].set(wa).at[:, A:A + 1].set(wc)
    b_head = jnp.zeros((1, LANE), jnp.float32)
    b_head = b_head.at[:, :A].set(ba.reshape(1, A)).at[:, A:A + 1].set(bc.reshape(1, 1))

    mm_dtype = jnp.bfloat16 if use_bf16 else jnp.float32
    w1_mm = w1.astype(mm_dtype)
    w_head_mm = w_head.astype(mm_dtype)
    b1_f32 = b1.reshape(1, H).astype(jnp.float32)

    # Batch tiling: tile of >= 8 sublanes, pad B up to a multiple of the tile.
    tb = min(block_batch, _round_up(B, 8))
    b_pad = _round_up(B, tb)
    state_mm = state.astype(mm_dtype)
    if b_pad != B:
        state_mm = jnp.pad(state_mm, ((0, b_pad - B), (0, 0)))

    out = pl.pallas_call(
        functools.partial(_actor_critic_kernel, A),
        out_shape=jax.ShapeDtypeStruct((b_pad, LANE), jnp.float32),
        grid_spec=pltpu.PrefetchScalarGridSpec(
            num_scalar_prefetch=0,
            grid=(b_pad // tb,),
            in_specs=[
                pl.BlockSpec((tb, in_dim), lambda i: (i, 0)),   # state: batch-blocked
                pl.BlockSpec((in_dim, H), lambda i: (0, 0)),    # w1: VMEM-resident
                pl.BlockSpec((1, H), lambda i: (0, 0)),         # b1: VMEM-resident
                pl.BlockSpec((H, LANE), lambda i: (0, 0)),      # fused head W: resident
                pl.BlockSpec((1, LANE), lambda i: (0, 0)),      # fused head b: resident
            ],
            out_specs=pl.BlockSpec((tb, LANE), lambda i: (i, 0)),
        ),
        compiler_params=pltpu.CompilerParams(
            dimension_semantics=("parallel",)),
    )(state_mm, w1_mm, b1_f32, w_head_mm, b_head)

    probs = out[:B, :A]
    value = out[:B, A:A + 1]
    return probs, value


def init_params(key, input_dim, hidden_dim, output_dim):
    # Deterministic synthetic init (PyTorch-style uniform(-1/sqrt(fan_in), 1/sqrt(fan_in))).
    k = jax.random.split(key, 6)

    def unif(kk, shape, fan_in):
        bound = 1.0 / jnp.sqrt(jnp.float32(fan_in))
        return jax.random.uniform(kk, shape, jnp.float32, -bound, bound)

    w1 = unif(k[0], (input_dim, hidden_dim), input_dim)      # stored [in, out]
    b1 = unif(k[1], (1, hidden_dim), input_dim)
    wa = unif(k[2], (hidden_dim, output_dim), hidden_dim)
    ba = unif(k[3], (1, output_dim), hidden_dim)
    wc = unif(k[4], (hidden_dim, 1), hidden_dim)
    bc = unif(k[5], (1, 1), hidden_dim)
    return w1, b1, wa, ba, wc, bc


if __name__ == "__main__":
    input_dim, hidden_dim, output_dim = 16, 128, 8
    batch = 8

    key = jax.random.PRNGKey(0)
    k_state, k_params = jax.random.split(key)
    state = jax.random.normal(k_state, (batch, input_dim), jnp.float32)
    params = init_params(k_params, input_dim, hidden_dim, output_dim)

    action_probs, state_value = jax.block_until_ready(
        actor_critic_forward(state, *params))

    # Reference computed with the same bf16 matmul operands / fp32 accumulation
    # the kernel uses, so the comparison is apples-to-apples.
    w1, b1, wa, ba, wc, bc = params
    mm = lambda a, b: jnp.dot(a.astype(jnp.bfloat16), b.astype(jnp.bfloat16),
                              preferred_element_type=jnp.float32)
    x_ref = jnp.maximum(mm(state, w1) + b1, 0.0)
    probs_ref = jax.nn.softmax(mm(x_ref, wa) + ba, axis=-1)
    value_ref = mm(x_ref, wc) + bc

    assert action_probs.shape == (batch, output_dim)
    assert state_value.shape == (batch, 1)
    assert jnp.allclose(action_probs, probs_ref, atol=2e-3)
    assert jnp.allclose(state_value, value_ref, atol=2e-3)
    assert jnp.allclose(jnp.sum(action_probs, axis=-1), 1.0, atol=2e-3)

    print("KERNEL_OK")
</pallas_src>

<mosaic_0001>
module attributes {stable_mosaic.version = 11 : i64} {
  func.func @_actor_critic_kernel(%arg0: i32, %arg1: memref<8x16xbf16, #tpu.memory_space<vmem>>, %arg2: memref<16x128xbf16, #tpu.memory_space<vmem>>, %arg3: memref<1x128xf32, #tpu.memory_space<vmem>>, %arg4: memref<128x128xbf16, #tpu.memory_space<vmem>>, %arg5: memref<1x128xf32, #tpu.memory_space<vmem>>, %arg6: memref<8x128xf32, #tpu.memory_space<vmem>>) attributes {dimension_semantics = [#tpu.dimension_semantics<parallel>], iteration_bounds = array<i64: 1>, scalar_prefetch = 0 : i64, scratch_operands = 0 : i64, tpu.core_type = #tpu.core_type<tc>, window_params = [{transform_indices = @transform_0, window_bounds = array<i64: 8, 16>}, {pipeline_mode = #tpu.pipeline_mode<synchronous>, transform_indices = @transform_1, window_bounds = array<i64: 16, 128>}, {pipeline_mode = #tpu.pipeline_mode<synchronous>, transform_indices = @transform_2, window_bounds = array<i64: 1, 128>}, {pipeline_mode = #tpu.pipeline_mode<synchronous>, transform_indices = @transform_3, window_bounds = array<i64: 128, 128>}, {pipeline_mode = #tpu.pipeline_mode<synchronous>, transform_indices = @transform_4, window_bounds = array<i64: 1, 128>}, {transform_indices = @transform_5, window_bounds = array<i64: 8, 128>}]} {
    %c0 = arith.constant 0 : index
    %c0_0 = arith.constant 0 : index
    %0 = vector.load %arg1[%c0, %c0_0] : memref<8x16xbf16, #tpu.memory_space<vmem>>, vector<8x16xbf16>
    %c0_1 = arith.constant 0 : index
    %c0_2 = arith.constant 0 : index
    %1 = vector.load %arg2[%c0_1, %c0_2] : memref<16x128xbf16, #tpu.memory_space<vmem>>, vector<16x128xbf16>
    %cst = arith.constant dense<0.000000e+00> : vector<8x128xf32>
    %2 = tpu.matmul %0, %1, %cst {dimension_numbers = #tpu.dot_dimension_numbers<[1], [0], [0], [1], [0, 0, 1, 1], [], []>} : vector<8x16xbf16>, vector<16x128xbf16>, vector<8x128xf32> -> vector<8x128xf32>
    %c0_3 = arith.constant 0 : index
    %c0_4 = arith.constant 0 : index
    %3 = vector.load %arg3[%c0_3, %c0_4] : memref<1x128xf32, #tpu.memory_space<vmem>>, vector<1x128xf32>
    %4 = vector.broadcast %3 : vector<1x128xf32> to vector<8x128xf32>
    %5 = arith.addf %2, %4 : vector<8x128xf32>
    %cst_5 = arith.constant 0.000000e+00 : f32
    %6 = vector.broadcast %cst_5 : f32 to vector<8x128xf32>
    %7 = arith.maximumf %5, %6 : vector<8x128xf32>
    %8 = arith.truncf %7 : vector<8x128xf32> to vector<8x128xbf16>
    %c0_6 = arith.constant 0 : index
    %c0_7 = arith.constant 0 : index
    %9 = vector.load %arg4[%c0_6, %c0_7] : memref<128x128xbf16, #tpu.memory_space<vmem>>, vector<128x128xbf16>
    %cst_8 = arith.constant dense<0.000000e+00> : vector<8x128xf32>
    %10 = tpu.matmul %8, %9, %cst_8 {dimension_numbers = #tpu.dot_dimension_numbers<[1], [0], [0], [1], [0, 0, 1, 1], [], []>} : vector<8x128xbf16>, vector<128x128xbf16>, vector<8x128xf32> -> vector<8x128xf32>
    %c0_9 = arith.constant 0 : index
    %c0_10 = arith.constant 0 : index
    %11 = vector.load %arg5[%c0_9, %c0_10] : memref<1x128xf32, #tpu.memory_space<vmem>>, vector<1x128xf32>
    %12 = vector.broadcast %11 : vector<1x128xf32> to vector<8x128xf32>
    %13 = arith.addf %10, %12 : vector<8x128xf32>
    %14 = tpu.iota {dimensions = array<i32: 1>} : vector<8x128xi32>
    %c8_i32 = arith.constant 8 : i32
    %15 = vector.broadcast %c8_i32 : i32 to vector<8x128xi32>
    %16 = arith.cmpi slt, %14, %15 : vector<8x128xi32>
    %cst_11 = arith.constant -1.000000e+30 : f32
    %17 = vector.broadcast %cst_11 : f32 to vector<8x128xf32>
    %18 = arith.select %16, %13, %17 : vector<8x128xi1>, vector<8x128xf32>
    %cst_12 = arith.constant dense<0xFF800000> : vector<8xf32>
    %19 = vector.multi_reduction <maximumf>, %18, %cst_12 [1] : vector<8x128xf32> to vector<8xf32>
    %20 = vector.shape_cast %19 : vector<8xf32> to vector<8x1xf32>
    %21 = vector.broadcast %20 : vector<8x1xf32> to vector<8x128xf32>
    %22 = arith.subf %18, %21 : vector<8x128xf32>
    %23 = math.exp %22 : vector<8x128xf32>
    %cst_13 = arith.constant dense<0.000000e+00> : vector<8xf32>
    %24 = vector.multi_reduction <add>, %23, %cst_13 [1] : vector<8x128xf32> to vector<8xf32>
    %25 = vector.shape_cast %24 : vector<8xf32> to vector<8x1xf32>
    %cst_14 = arith.constant 1.000000e+00 : f32
    %26 = vector.broadcast %cst_14 : f32 to vector<8x1xf32>
    %27 = arith.divf %26, %25 : vector<8x1xf32>
    %28 = vector.broadcast %27 : vector<8x1xf32> to vector<8x128xf32>
    %29 = arith.mulf %23, %28 : vector<8x128xf32>
    %c8_i32_15 = arith.constant 8 : i32
    %30 = vector.broadcast %c8_i32_15 : i32 to vector<8x128xi32>
    %31 = arith.cmpi eq, %14, %30 : vector<8x128xi32>
    %cst_16 = arith.constant 0.000000e+00 : f32
    %32 = vector.broadcast %cst_16 : f32 to vector<8x128xf32>
    %33 = arith.select %31, %13, %32 : vector<8x128xi1>, vector<8x128xf32>
    %34 = arith.addf %29, %33 : vector<8x128xf32>
    %c0_17 = arith.constant 0 : index
    %c0_18 = arith.constant 0 : index
    %35 = vector.load %arg6[%c0_17, %c0_18] : memref<8x128xf32, #tpu.memory_space<vmem>>, vector<8x128xf32>
    tpu.vector_store %arg6[%c0_17, %c0_18], %34 {strides = array<i32>} : memref<8x128xf32, #tpu.memory_space<vmem>>, vector<8x128xf32>,
    return
  }
  func.func @transform_0(%arg0: i32) -> (i32, i32) {
    %c0_i32 = arith.constant 0 : i32
    %c0_i32_0 = arith.constant 0 : i32
    return %arg0, %c0_i32 : i32, i32
  }
  func.func @transform_1(%arg0: i32) -> (i32, i32) {
    %c0_i32 = arith.constant 0 : i32
    %c0_i32_0 = arith.constant 0 : i32
    %c0_i32_1 = arith.constant 0 : i32
    return %c0_i32, %c0_i32_0 : i32, i32
  }
  func.func @transform_2(%arg0: i32) -> (i32, i32) {
    %c0_i32 = arith.constant 0 : i32
    %c0_i32_0 = arith.constant 0 : i32
    %c0_i32_1 = arith.constant 0 : i32
    return %c0_i32, %c0_i32_0 : i32, i32
  }
  func.func @transform_3(%arg0: i32) -> (i32, i32) {
    %c0_i32 = arith.constant 0 : i32
    %c0_i32_0 = arith.constant 0 : i32
    %c0_i32_1 = arith.constant 0 : i32
    return %c0_i32, %c0_i32_0 : i32, i32
  }
  func.func @transform_4(%arg0: i32) -> (i32, i32) {
    %c0_i32 = arith.constant 0 : i32
    %c0_i32_0 = arith.constant 0 : i32
    %c0_i32_1 = arith.constant 0 : i32
    return %c0_i32, %c0_i32_0 : i32, i32
  }
  func.func @transform_5(%arg0: i32) -> (i32, i32) {
    %c0_i32 = arith.constant 0 : i32
    %c0_i32_0 = arith.constant 0 : i32
    return %arg0, %c0_i32 : i32, i32
  }
}

</mosaic_0001>

<llo_original>
// kernel: tpu_custom_call.1
$region0: #{tpu_custom_call.1}
  #allocation0 [shape = 'u32[]', space=smem, size = 0x4, offset = 0x4, fixed_abs, tag = 'smem constant byte address 0x4 - core index']
  #allocation1 [shape = 'u32[72,128]{1,0:T(1,128)}', space=vmem, size = 0x9000, scoped, tag = 'internal scratch']
  %s0 = inlined_call_operand.hbm [shape: bf16[8,16], index: 0, kind: input, shape index: {}]
  %s1 = inlined_call_operand.hbm [shape: bf16[16,128], index: 1, kind: input, shape index: {}]
  %s2 = inlined_call_operand.vmem [shape: f32[1,128], index: 2, kind: input, shape index: {}]
  %s3 = inlined_call_operand.hbm [shape: bf16[128,128], index: 3, kind: input, shape index: {}]
  %s4 = inlined_call_operand.vmem [shape: f32[1,128], index: 4, kind: input, shape index: {}]
  %s5 = inlined_call_operand.hbm [shape: f32[8,128], index: 5, kind: output, shape index: {}]
  %s6 = sld [smem:[#allocation0]]
  $region42: #{tpu_custom_call.1} parent=0
    _
  %s8 = ssub.s32 1, %s6
  %s9 = scalar_select 0, %s8, %s6
  $region1: #{tpu_custom_call.1} parent=0
    #allocation2 [shape = 'u8[2048]{0}', space=vmem, size = 0x800, scoped, tag = 'input window, operand 0, single buffered']
    #allocation3 [shape = 's32[1]{0}', space=sflag, size = 0x4, scoped, tag = 'scoped memory for tpu_custom_call.1']
    #allocation4 [shape = 's32[1]{0}', space=sflag, size = 0x4, scoped, tag = 'scoped memory for tpu_custom_call.1']
    #allocation5 [shape = 'u8[4096]{0}', space=vmem, size = 0x1000, scoped, tag = 'input window, operand 1, single buffered']
    #allocation6 [shape = 's32[1]{0}', space=sflag, size = 0x4, scoped, tag = 'scoped memory for tpu_custom_call.1']
    #allocation7 [shape = 'u8[32768]{0}', space=vmem, size = 0x8000, scoped, tag = 'input window, operand 3, single buffered']
    #allocation8 [shape = 'u8[4096]{0}', space=vmem, size = 0x1000, scoped, tag = 'output window, operand 0, single buffered']
    %10 = vsyncpa [#allocation3], 0
    %11 = vsyncpa [#allocation6], 0
    %12 = vsyncpa [#allocation4], 0
    // Predicated region
    $region2: #{tpu_custom_call.1} parent=1 // pred_check
      _
    $region3: #{tpu_custom_call.1} parent=1 // pred_check_branch
      %14 = sbr.rel (0) target = $region5
    $region4: #{tpu_custom_call.1} parent=1 // pred_region
      %16 = vsyncadd [#allocation3], 0
      %s18 = sshll.u32 %s0, 4
      %s19 = int_to_ptr.hbm [resolvable:$true] %s18
      %s20 = sshll.u32 [#allocation2], 4
      %s21 = int_to_ptr.vmem [resolvable:$true] %s20
      %23 = dma.hbm_to_vmem [thread:$0]  %s19, 64, %s21, [#allocation3]
    $region5: #{tpu_custom_call.1} parent=1 // pred_fallthru
      _
    // Predicated region
    $region6: #{tpu_custom_call.1} parent=1 // pred_check
      _
    $region7: #{tpu_custom_call.1} parent=1 // pred_check_branch
      %25 = sbr.rel (0) target = $region9
    $region8: #{tpu_custom_call.1} parent=1 // pred_region
      %27 = vsyncadd [#allocation6], 0
      %s28 = sshll.u32 %s1, 4
      %s29 = int_to_ptr.hbm [resolvable:$true] %s28
      %s30 = sshll.u32 [#allocation5], 4
      %s31 = int_to_ptr.vmem [resolvable:$true] %s30
      %36 = dma.hbm_to_vmem [thread:$0]  %s29, 128, %s31, [#allocation6], 64, 64, 4
    $region9: #{tpu_custom_call.1} parent=1 // pred_fallthru
      _
    // Predicated region
    $region10: #{tpu_custom_call.1} parent=1 // pred_check
      _
    $region11: #{tpu_custom_call.1} parent=1 // pred_check_branch
      %38 = sbr.rel (0) target = $region13
    $region12: #{tpu_custom_call.1} parent=1 // pred_region
      _
    $region13: #{tpu_custom_call.1} parent=1 // pred_fallthru
      _
    // Predicated region
    $region14: #{tpu_custom_call.1} parent=1 // pred_check
      _
    $region15: #{tpu_custom_call.1} parent=1 // pred_check_branch
      %40 = sbr.rel (0) target = $region17
    $region16: #{tpu_custom_call.1} parent=1 // pred_region
      %42 = vsyncadd [#allocation6], 0
      %s43 = sshll.u32 %s3, 4
      %s44 = int_to_ptr.hbm [resolvable:$true] %s43
      %s45 = sshll.u32 [#allocation7], 4
      %s46 = int_to_ptr.vmem [resolvable:$true] %s45
      %51 = dma.hbm_to_vmem [thread:$0]  %s44, 1024, %s46, [#allocation6], 64, 64, 4
    $region17: #{tpu_custom_call.1} parent=1 // pred_fallthru
      _
    // Predicated region
    $region18: #{tpu_custom_call.1} parent=1 // pred_check
      _
    $region19: #{tpu_custom_call.1} parent=1 // pred_check_branch
      %53 = sbr.rel (0) target = $region21
    $region20: #{tpu_custom_call.1} parent=1 // pred_region
      _
    $region21: #{tpu_custom_call.1} parent=1 // pred_fallthru
      _
    // Predicated region
    $region22: #{tpu_custom_call.1} parent=1 // pred_check
      _
    $region23: #{tpu_custom_call.1} parent=1 // pred_check_branch
      %55 = sbr.rel (0) target = $region25
    $region24: #{tpu_custom_call.1} parent=1 // pred_region
      %57 = dma.done [#allocation3], 64
    $region25: #{tpu_custom_call.1} parent=1 // pred_fallthru
      _
    // Predicated region
    $region26: #{tpu_custom_call.1} parent=1 // pred_check
      _
    $region27: #{tpu_custom_call.1} parent=1 // pred_check_branch
      %59 = sbr.rel (0) target = $region29
    $region28: #{tpu_custom_call.1} parent=1 // pred_region
      %61 = dma.done [#allocation6], 128
    $region29: #{tpu_custom_call.1} parent=1 // pred_fallthru
      _
    // Predicated region
    $region30: #{tpu_custom_call.1} parent=1 // pred_check
      _
    $region31: #{tpu_custom_call.1} parent=1 // pred_check_branch
      %63 = sbr.rel (0) target = $region33
    $region32: #{tpu_custom_call.1} parent=1 // pred_region
      %65 = dma.done [#allocation6], 1024
    $region33: #{tpu_custom_call.1} parent=1 // pred_fallthru
      _
    %v67 = vld [vmem:[#allocation2] sm:$0xf]
    %v68 = vld [vmem:[#allocation5] sm:$0xf]
    %v69 = vld [vmem:[#allocation5 + $0x4] sm:$0xf]
    %v70 = vld [vmem:[%s2] sm:$0x1]
    %v72 = vperm.slane %v70, 0
    %v76 = vunpack.c.l.b16 %v68
    %v77 = vunpack.c.l.b16 %v69
    %v78 = vpack.c.b16 %v77, %v76
    %vm80 = vcmask 130048
    %v82 = vsel %vm80, %v67, 0
    %84 = vmatpush.bf16.msra.mxu0 0
    %85 = vmatpush.bf16.msra.mxu0 0
    %86 = vmatpush.bf16.msra.mxu0 0
    %87 = vmatpush.bf16.msra.mxu0 0
    %88 = vmatpush.bf16.msra.mxu0 0
    %89 = vmatpush.bf16.msra.mxu0 0
    %90 = vmatpush.bf16.msra.mxu0 0
    %91 = vmatpush.bf16.msra.mxu0 %v78
    %92 = vmatmul.bf16.gmra.mxu0 %v82
    %v93 = vpop.f32.mrf.mxu0
    %v94 = vadd.f32 %v72, %v93
    %v95 = vpop.f32.mrf.mxu0
    %96 = vdwg.mxu0
    %v97 = vmax.f32 %v94, 0.0
    %v98 = vpack.c.bf16 %v97, %v97
    %v99 = vld [vmem:[#allocation7] sm:$0xf]
    %v100 = vld [vmem:[#allocation7 + $0x4] sm:$0xf]
    %v101 = vld [vmem:[#allocation7 + $0x8] sm:$0xf]
    %v102 = vld [vmem:[#allocation7 + $0xc] sm:$0xf]
    %v103 = vld [vmem:[#allocation7 + $0x10] sm:$0xf]
    %v104 = vld [vmem:[#allocation7 + $0x14] sm:$0xf]
    %v105 = vld [vmem:[#allocation7 + $0x18] sm:$0xf]
    %v106 = vld [vmem:[#allocation7 + $0x1c] sm:$0xf]
    %v107 = vld [vmem:[#allocation7 + $0x20] sm:$0xf]
    %v108 = vld [vmem:[#allocation7 + $0x24] sm:$0xf]
    %v109 = vld [vmem:[#allocation7 + $0x28] sm:$0xf]
    %v110 = vld [vmem:[#allocation7 + $0x2c] sm:$0xf]
    %v111 = vld [vmem:[#allocation7 + $0x30] sm:$0xf]
    %v112 = vld [vmem:[#allocation7 + $0x34] sm:$0xf]
    %v113 = vld [vmem:[#allocation7 + $0x38] sm:$0xf]
    %v114 = vld [vmem:[#allocation7 + $0x3c] sm:$0xf]
    %v115 = vld [vmem:[%s4] sm:$0x1]
    %v117 = vperm.slane %v115, 0
    %v135 = vunpack.c.l.b16 %v99
    %v136 = vunpack.c.l.b16 %v100
    %v137 = vunpack.c.l.b16 %v101
    %v138 = vunpack.c.l.b16 %v102
    %v139 = vunpack.c.l.b16 %v103
    %v140 = vunpack.c.l.b16 %v104
    %v141 = vunpack.c.l.b16 %v105
    %v142 = vunpack.c.l.b16 %v106
    %v143 = vunpack.c.l.b16 %v107
    %v144 = vunpack.c.l.b16 %v108
    %v145 = vunpack.c.l.b16 %v109
    %v146 = vunpack.c.l.b16 %v110
    %v147 = vunpack.c.l.b16 %v111
    %v148 = vunpack.c.l.b16 %v112
    %v149 = vunpack.c.l.b16 %v113
    %v150 = vunpack.c.l.b16 %v114
    %v151 = vpack.c.b16 %v136, %v135
    %v152 = vpack.c.b16 %v138, %v137
    %v153 = vpack.c.b16 %v140, %v139
    %v154 = vpack.c.b16 %v142, %v141
    %v155 = vpack.c.b16 %v144, %v143
    %v156 = vpack.c.b16 %v146, %v145
    %v157 = vpack.c.b16 %v148, %v147
    %v158 = vpack.c.b16 %v150, %v149
    %167 = vmatpush.bf16.msra.mxu0 %v158
    %168 = vmatpush.bf16.msra.mxu0 %v157
    %169 = vmatpush.bf16.msra.mxu0 %v156
    %170 = vmatpush.bf16.msra.mxu0 %v155
    %171 = vmatpush.bf16.msra.mxu0 %v154
    %172 = vmatpush.bf16.msra.mxu0 %v153
    %173 = vmatpush.bf16.msra.mxu0 %v152
    %174 = vmatpush.bf16.msra.mxu0 %v151
    %175 = vmatmul.bf16.gmra.mxu0 %v98
    %v176 = vpop.f32.mrf.mxu0
    %v177 = vadd.f32 %v117, %v176
    %v178 = vpop.f32.mrf.mxu0
    %179 = vdwg.mxu0
    %v180 = vlaneseq
    %v181 = vand.u32 %v180, 127
    %vm182 = vcmp.lt.s32.totalorder %v181, 8
    %v183 = vsel %vm182, %v177, -1e+30
    %184 = vmax.xlane.f32.xlu0 %v183
    %v185 = vpop.xlane.xlu0 %184
    %v186 = vsub.f32 %v183, %v185
    %v187 = vmul.f32 %v186, 1.442695
    %v188 = vpow.pop %v187
    %189 = vadd.xlane.f32.xlu0 %v188
    %v190 = vpop.xlane.xlu0 %189
    %v191 = vrcp.pop %v190
    %v192 = vmul.f32 %v190, %v191
    %v193 = vsub.f32 1.0, %v192
    %v194 = vmul.f32 %v191, %v193
    %v195 = vadd.f32 %v191, %v194
    %vm196 = vweird.f32 %v190
    %vm197 = vweird.f32 %v191
    %vm198 = vmor %vm196, %vm197
    %v199 = vsel %vm198, %v191, %v195
    %v200 = vand.u32 2147483647, %v190
    %vm201 = vcmp.eq.f32.partialorder %v200, 8.507059e+37
    %v202 = vand.u32 %v190, 2147483648
    %v203 = vor.u32 1.1754944e-38, %v202
    %v204 = vsel %vm201, %v203, %v199
    %v205 = vmul.f32 1.0, %v204
    %v206 = vmul.f32 %v188, %v205
    %vm207 = vcmp.eq.s32.totalorder %v181, 8
    %v208 = vsel %vm207, %v177, 0.0
    %v209 = vadd.f32 %v206, %v208
    %210 = vst [vmem:[#allocation8] sm:$0xff] %v209
    // Predicated region
    $region34: #{tpu_custom_call.1} parent=1 // pred_check
      _
    $region35: #{tpu_custom_call.1} parent=1 // pred_check_branch
      %212 = sbr.rel (0) target = $region37
    $region36: #{tpu_custom_call.1} parent=1 // pred_region
      %214 = vsyncadd [#allocation4], 0
      %s216 = sshll.u32 [#allocation8], 4
      %s217 = int_to_ptr.vmem [resolvable:$true] %s216
      %s218 = sshll.u32 %s5, 4
      %s219 = int_to_ptr.hbm [resolvable:$true] %s218
      %221 = dma.vmem_to_hbm [thread:$0]  %s217, 128, %s219, [#allocation4]
    $region37: #{tpu_custom_call.1} parent=1 // pred_fallthru
      _
    // Predicated region
    $region38: #{tpu_custom_call.1} parent=1 // pred_check
      _
    $region39: #{tpu_custom_call.1} parent=1 // pred_check_branch
      %223 = sbr.rel (0) target = $region41
    $region40: #{tpu_custom_call.1} parent=1 // pred_region
      %225 = dma.done [#allocation4], 128
    $region41: #{tpu_custom_call.1} parent=1 // pred_fallthru
      _
    %226 = vsyncpa [#allocation3], 1
    %227 = vsyncpa [#allocation6], 1
    %228 = vsyncpa [#allocation4], 1

</llo_original>
